<compile_context>
chip_gen: v7x
topology: tpu7x:2x2x1
jax: 0.10.0
libtpu: 0.0.40
codegen_flags: <defaults>
</compile_context>

<pallas_src>
import jax
import jax.numpy as jnp
from jax import lax
from jax.experimental import pallas as pl
from jax.experimental.pallas import tpu as pltpu


# ------------------------------ helpers --------------------------------------


def _round_up(x, m):
    return (x + m - 1) // m * m


def _largest_divisor(n, target):
    d = min(n, max(1, target))
    while n % d:
        d -= 1
    return d


def _uniform(key, shape, scale=0.1, dtype=jnp.float32):
    return jax.random.uniform(key, shape, jnp.float32, -scale, scale).astype(dtype)


# ------------------------------ Pallas kernels -------------------------------


def _gate_input_kernel(x_ref, wx_ref, bg_ref, xg_ref):
    """Batched, parallel pass A: xg = [emb;ctx] @ W_gx + b_g for a tile of rows."""
    xg_ref[...] = (
        jnp.dot(x_ref[...].astype(wx_ref.dtype), wx_ref[...],
                preferred_element_type=jnp.float32)
        + bg_ref[...].astype(jnp.float32))


def _lstm_recurrence_kernel(xg_ref, wh_ref, h0_ref, c0_ref,
                            hseq_ref, hn_ref, cn_ref):
    """Serial pass B: per-step the ONLY matmul is h @ W_gh (the x contribution and the
    bias were precomputed in pass A).  Gates are lane-aligned [*, Hp] tiles."""
    chunk = pl.program_id(0)
    Hp = wh_ref.shape[0]
    Tt = xg_ref.shape[0]

    # Recurrent carry lives in the resident output blocks hn_ref / cn_ref.
    @pl.when(chunk == 0)
    def _():
        hn_ref[...] = h0_ref[...]
        cn_ref[...] = c0_ref[...]

    def step(t, carry):
        h, c = carry
        gates = xg_ref[t] + jnp.dot(h.astype(wh_ref.dtype), wh_ref[...],
                                    preferred_element_type=jnp.float32)   # [B, 4*Hp] f32
        i = jax.nn.sigmoid(gates[:, 0 * Hp:1 * Hp])
        f = jax.nn.sigmoid(gates[:, 1 * Hp:2 * Hp])
        g = jnp.tanh(gates[:, 2 * Hp:3 * Hp])
        o = jax.nn.sigmoid(gates[:, 3 * Hp:4 * Hp])
        c_new = f * c + i * g
        h_new = o * jnp.tanh(c_new)
        hseq_ref[t] = h_new
        return h_new, c_new

    h, c = lax.fori_loop(0, Tt, step, (hn_ref[...], cn_ref[...]), unroll=True)
    hn_ref[...] = h
    cn_ref[...] = c


def _output_proj_kernel(x_ref, h_ref, wx_ref, wh_ref, b_ref, out_ref):
    """Batched, parallel, V-tiled pass C: logits = [emb;ctx] @ W_ox + h @ W_oh + b_o."""
    acc = jnp.dot(x_ref[...].astype(wx_ref.dtype), wx_ref[...],
                  preferred_element_type=jnp.float32)
    acc = acc + jnp.dot(h_ref[...].astype(wh_ref.dtype), wh_ref[...],
                        preferred_element_type=jnp.float32)
    out_ref[...] = acc + b_ref[...].astype(jnp.float32)


# --------------------------------- module ------------------------------------


class Decoder:
    """Pallas port of the PyTorch Decoder module (eval-mode forward)."""

    def __init__(self, key, output_dim, hidden_dim, embed_dim, context_dim,
                 dropout=0.1, param_dtype=jnp.bfloat16):
        self.output_dim = output_dim
        self.hidden_dim = hidden_dim
        self.embed_dim = embed_dim
        self.context_dim = context_dim
        V, H, E, C = output_dim, hidden_dim, embed_dim, context_dim
        EC = E + C
        Hp = _round_up(H, 128)
        Vp = _round_up(V, 128)
        if Vp > 512:
            Vp = _round_up(Vp, 512)
        self.EC, self.Hp, self.Vp = EC, Hp, Vp
        self.v_tile = min(Vp, 512)

        ks = jax.random.split(key, 7)
        # Raw (unpadded) parameters — these define the math and feed the reference.
        self.emb = _uniform(ks[0], (V, E), dtype=param_dtype)
        self.w_gx_raw = _uniform(ks[1], (EC, 4 * H), dtype=param_dtype)  # x -> gates
        self.w_gh_raw = _uniform(ks[2], (H, 4 * H), dtype=param_dtype)   # h -> gates
        self.b_g_raw = _uniform(ks[3], (4 * H,), dtype=param_dtype)      # b_ih + b_hh
        self.w_ox_raw = _uniform(ks[4], (EC, V), dtype=param_dtype)      # [emb;ctx] -> V
        self.w_oh_raw = _uniform(ks[5], (H, V), dtype=param_dtype)       # h -> V
        self.b_o_raw = _uniform(ks[6], (V,), dtype=param_dtype)

        # Padded, lane-aligned kernel weights.  Each gate occupies a full Hp-lane tile;
        # padded rows/cols are ZERO so padded hidden lanes stay exactly zero.
        def pad_gate_cols(w):                     # [in, 4H] -> [in, 4*Hp]
            w4 = w.reshape(w.shape[0], 4, H)
            out = jnp.zeros((w.shape[0], 4, Hp), w.dtype).at[:, :, :H].set(w4)
            return out.reshape(w.shape[0], 4 * Hp)

        self.w_gx = pad_gate_cols(self.w_gx_raw)                              # [EC, 4Hp]
        self.w_gh = (jnp.zeros((Hp, 4 * Hp), param_dtype)
                     .at[:H, :].set(pad_gate_cols(self.w_gh_raw)))            # [Hp, 4Hp]
        bg4 = self.b_g_raw.reshape(4, H)
        self.b_g = (jnp.zeros((1, 4, Hp), param_dtype)
                    .at[0, :, :H].set(bg4).reshape(1, 4 * Hp))                # [1, 4Hp]
        self.w_ox = jnp.zeros((EC, Vp), param_dtype).at[:, :V].set(self.w_ox_raw)
        self.w_oh = jnp.zeros((Hp, Vp), param_dtype).at[:H, :V].set(self.w_oh_raw)
        self.b_o = jnp.zeros((1, Vp), param_dtype).at[0, :V].set(self.b_o_raw)

    # ------------------------------------------------------------------------

    def decode_sequence(self, tokens, state, contexts, time_chunk=4):
        """Teacher-forced decode of a whole sequence.

        tokens: [T, B] int32, state: ([B,H], [B,H]) f32, contexts: [T, B, C] f32
        returns (logits [T,B,V] f32, (h [B,H], c [B,H]))."""
        h0, c0 = state
        tokens = tokens.astype(jnp.int32)
        T, B = tokens.shape
        V, H = self.output_dim, self.hidden_dim
        EC, Hp, Vp = self.EC, self.Hp, self.Vp
        f32 = jnp.float32

        # Embedding gather + [emb; ctx] concat in the wrapper (feedback #1a): no V x E
        # table in VMEM, no one-hot matmul, no per-step lane-axis concat in the kernels.
        emb = jnp.take(self.emb, tokens, axis=0).astype(f32)                  # [T,B,E]
        x = jnp.concatenate([emb, contexts.astype(f32)], axis=-1)            # [T,B,EC]

        TB = T * B
        TBp = _round_up(TB, 8)
        tm = TBp if TBp <= 256 else 256
        TBp = _round_up(TBp, tm)
        x2d = jnp.zeros((TBp, EC), f32).at[:TB].set(x.reshape(TB, EC))

        # ---- pass A: batched input-gate contribution (parallel, M = T*B rows) -------
        xg2d = pl.pallas_call(
            _gate_input_kernel,
            grid=(TBp // tm,),
            in_specs=[
                pl.BlockSpec((tm, EC), lambda i: (i, 0)),
                pl.BlockSpec((EC, 4 * Hp), lambda i: (0, 0)),     # resident weight
                pl.BlockSpec((1, 4 * Hp), lambda i: (0, 0)),      # resident bias
            ],
            out_specs=pl.BlockSpec((tm, 4 * Hp), lambda i: (i, 0)),
            out_shape=jax.ShapeDtypeStruct((TBp, 4 * Hp), f32),
            compiler_params=pltpu.CompilerParams(dimension_semantics=("parallel",)),
        )(x2d, self.w_gx, self.b_g)
        xg = xg2d[:TB].reshape(T, B, 4 * Hp)

        # ---- pass B: serial LSTM recurrence, time-chunked grid ----------------------
        Tt = _largest_divisor(T, time_chunk)
        h0p = jnp.zeros((B, Hp), f32).at[:, :H].set(h0.astype(f32))
        c0p = jnp.zeros((B, Hp), f32).at[:, :H].set(c0.astype(f32))
        hseq, h_n, c_n = pl.pallas_call(
            _lstm_recurrence_kernel,
            grid=(T // Tt,),
            in_specs=[
                pl.BlockSpec((Tt, B, 4 * Hp), lambda i: (i, 0, 0)),   # xg chunk
                pl.BlockSpec((Hp, 4 * Hp), lambda i: (0, 0)),         # resident W_gh
                pl.BlockSpec((B, Hp), lambda i: (0, 0)),              # h0
                pl.BlockSpec((B, Hp), lambda i: (0, 0)),              # c0
            ],
            out_specs=[
                pl.BlockSpec((Tt, B, Hp), lambda i: (i, 0, 0)),       # h per step
                pl.BlockSpec((B, Hp), lambda i: (0, 0)),              # resident h carry
                pl.BlockSpec((B, Hp), lambda i: (0, 0)),              # resident c carry
            ],
            out_shape=(
                jax.ShapeDtypeStruct((T, B, Hp), f32),
                jax.ShapeDtypeStruct((B, Hp), f32),
                jax.ShapeDtypeStruct((B, Hp), f32),
            ),
            compiler_params=pltpu.CompilerParams(dimension_semantics=("arbitrary",)),
        )(xg, self.w_gh, h0p, c0p)

        # ---- pass C: batched output projection, lane-dense V tiles (parallel) -------
        h2d = jnp.zeros((TBp, Hp), f32).at[:TB].set(hseq.reshape(TB, Hp))
        tv = self.v_tile
        logits2d = pl.pallas_call(
            _output_proj_kernel,
            grid=(TBp // tm, Vp // tv),
            in_specs=[
                pl.BlockSpec((tm, EC), lambda i, j: (i, 0)),
                pl.BlockSpec((tm, Hp), lambda i, j: (i, 0)),
                pl.BlockSpec((EC, tv), lambda i, j: (0, j)),          # V-tiled W_ox
                pl.BlockSpec((Hp, tv), lambda i, j: (0, j)),          # V-tiled W_oh
                pl.BlockSpec((1, tv), lambda i, j: (0, j)),           # V-tiled bias
            ],
            out_specs=pl.BlockSpec((tm, tv), lambda i, j: (i, j)),
            out_shape=jax.ShapeDtypeStruct((TBp, Vp), f32),
            compiler_params=pltpu.CompilerParams(
                dimension_semantics=("parallel", "parallel")),
        )(x2d, h2d, self.w_ox, self.w_oh, self.b_o)

        logits = logits2d[:TB, :V].reshape(T, B, V)
        return logits, (h_n[:, :H], c_n[:, :H])

    # ------------------------------------------------------------------------

    def __call__(self, x, hidden, context):
        """Matches the PyTorch Decoder.forward signature:
        x [B] int, hidden = (h, c) each [1,B,H], context [1,B,C]
        -> (prediction [B,V], (h [1,B,H], c [1,B,H]))."""
        h0, c0 = hidden
        logits, (h_n, c_n) = self.decode_sequence(
            x[None, :], (h0[0], c0[0]), context, time_chunk=1)
        return logits[0], (h_n[None], c_n[None])


# --------------------------- pure-JAX reference -------------------------------


def reference_decode(dec, tokens, h0, c0, contexts):
    """Pure-JAX reference mirroring the kernel math with the unpadded weights."""
    H, V = dec.hidden_dim, dec.output_dim
    T, B = tokens.shape
    emb = jnp.take(dec.emb, tokens, axis=0).astype(jnp.float32)        # [T,B,E]
    x = jnp.concatenate([emb, contexts.astype(jnp.float32)], axis=-1)  # [T,B,EC]
    bg = dec.b_g_raw.astype(jnp.float32)
    bo = dec.b_o_raw.astype(jnp.float32)
    h, c = h0, c0
    hs = []
    for t in range(T):
        gates = (jnp.dot(x[t].astype(dec.w_gx_raw.dtype), dec.w_gx_raw,
                         preferred_element_type=jnp.float32)
                 + jnp.dot(h.astype(dec.w_gh_raw.dtype), dec.w_gh_raw,
                           preferred_element_type=jnp.float32) + bg)
        i = jax.nn.sigmoid(gates[:, 0 * H:1 * H])
        f = jax.nn.sigmoid(gates[:, 1 * H:2 * H])
        g = jnp.tanh(gates[:, 2 * H:3 * H])
        o = jax.nn.sigmoid(gates[:, 3 * H:4 * H])
        c = f * c + i * g
        h = o * jnp.tanh(c)
        hs.append(h)
    hs = jnp.stack(hs, axis=0)                                          # [T,B,H]
    logits = (jnp.dot(x.reshape(T * B, -1).astype(dec.w_ox_raw.dtype), dec.w_ox_raw,
                      preferred_element_type=jnp.float32)
              + jnp.dot(hs.reshape(T * B, H).astype(dec.w_oh_raw.dtype), dec.w_oh_raw,
                        preferred_element_type=jnp.float32) + bo)
    return logits.reshape(T, B, V), h, c


# ----------------------------------- main -------------------------------------


if __name__ == "__main__":
    key = jax.random.PRNGKey(0)
    B, T = 2, 8
    V, H, E, C = 24, 32, 16, 64   # output_dim, hidden_dim, embed_dim, context_dim

    kp, kt, kc, kh, kcell = jax.random.split(key, 5)
    dec = Decoder(kp, output_dim=V, hidden_dim=H, embed_dim=E, context_dim=C)

    tokens = jax.random.randint(kt, (T, B), 0, V, dtype=jnp.int32)
    contexts = (0.5 * jax.random.normal(kc, (T, B, C))).astype(jnp.float32)
    h0 = (0.1 * jax.random.normal(kh, (B, H))).astype(jnp.float32)
    c0 = (0.1 * jax.random.normal(kcell, (B, H))).astype(jnp.float32)

    # Single step: exactly the PyTorch Decoder.forward signature / semantics.
    pred, (h1, c1) = dec(tokens[0], (h0[None], c0[None]), contexts[0:1])
    assert pred.shape == (B, V), pred.shape
    assert h1.shape == (1, B, H) and c1.shape == (1, B, H)

    # Teacher-forced decode of the whole sequence (time-chunked recurrent grid).
    logits, (hT, cT) = dec.decode_sequence(tokens, (h0, c0), contexts, time_chunk=4)
    logits = jax.block_until_ready(logits)

    assert logits.shape == (T, B, V), logits.shape
    assert logits.dtype == jnp.float32
    assert bool(jnp.all(jnp.isfinite(logits)))
    # step 0 of the sequence run must match the single-step module call (same kernels)
    assert bool(jnp.allclose(pred, logits[0], atol=1e-5, rtol=1e-5))

    # correctness check against a pure-JAX reference
    ref_logits, ref_h, ref_c = reference_decode(dec, tokens, h0, c0, contexts)
    assert bool(jnp.allclose(logits, ref_logits, atol=5e-3, rtol=5e-3))
    assert bool(jnp.allclose(hT, ref_h, atol=5e-3, rtol=5e-3))
    assert bool(jnp.allclose(cT, ref_c, atol=5e-3, rtol=5e-3))

    print("KERNEL_OK")
</pallas_src>

<mosaic_0001>
module attributes {stable_mosaic.version = 11 : i64} {
  func.func @_gate_input_kernel(%arg0: i32, %arg1: memref<8x80xf32, #tpu.memory_space<vmem>>, %arg2: memref<80x512xbf16, #tpu.memory_space<vmem>>, %arg3: memref<1x512xbf16, #tpu.memory_space<vmem>>, %arg4: memref<8x512xf32, #tpu.memory_space<vmem>>) attributes {dimension_semantics = [#tpu.dimension_semantics<parallel>], iteration_bounds = array<i64: 1>, scalar_prefetch = 0 : i64, scratch_operands = 0 : i64, tpu.core_type = #tpu.core_type<tc>, window_params = [{transform_indices = @transform_0, window_bounds = array<i64: 8, 80>}, {pipeline_mode = #tpu.pipeline_mode<synchronous>, transform_indices = @transform_1, window_bounds = array<i64: 80, 512>}, {pipeline_mode = #tpu.pipeline_mode<synchronous>, transform_indices = @transform_2, window_bounds = array<i64: 1, 512>}, {transform_indices = @transform_3, window_bounds = array<i64: 8, 512>}]} {
    %c0 = arith.constant 0 : index
    %c0_0 = arith.constant 0 : index
    %0 = vector.load %arg1[%c0, %c0_0] : memref<8x80xf32, #tpu.memory_space<vmem>>, vector<8x80xf32>
    %1 = arith.truncf %0 : vector<8x80xf32> to vector<8x80xbf16>
    %c0_1 = arith.constant 0 : index
    %c0_2 = arith.constant 0 : index
    %2 = vector.load %arg2[%c0_1, %c0_2] : memref<80x512xbf16, #tpu.memory_space<vmem>>, vector<80x512xbf16>
    %cst = arith.constant dense<0.000000e+00> : vector<8x512xf32>
    %3 = tpu.matmul %1, %2, %cst {dimension_numbers = #tpu.dot_dimension_numbers<[1], [0], [0], [1], [0, 0, 1, 1], [], []>} : vector<8x80xbf16>, vector<80x512xbf16>, vector<8x512xf32> -> vector<8x512xf32>
    %c0_3 = arith.constant 0 : index
    %c0_4 = arith.constant 0 : index
    %4 = vector.load %arg3[%c0_3, %c0_4] : memref<1x512xbf16, #tpu.memory_space<vmem>>, vector<1x512xbf16>
    %5 = arith.extf %4 : vector<1x512xbf16> to vector<1x512xf32>
    %6 = vector.broadcast %5 : vector<1x512xf32> to vector<8x512xf32>
    %7 = arith.addf %3, %6 : vector<8x512xf32>
    %c0_5 = arith.constant 0 : index
    %c0_6 = arith.constant 0 : index
    %8 = vector.load %arg4[%c0_5, %c0_6] : memref<8x512xf32, #tpu.memory_space<vmem>>, vector<8x512xf32>
    tpu.vector_store %arg4[%c0_5, %c0_6], %7 {strides = array<i32>} : memref<8x512xf32, #tpu.memory_space<vmem>>, vector<8x512xf32>,
    return
  }
  func.func @transform_0(%arg0: i32) -> (i32, i32) {
    %c0_i32 = arith.constant 0 : i32
    %c0_i32_0 = arith.constant 0 : i32
    return %arg0, %c0_i32 : i32, i32
  }
  func.func @transform_1(%arg0: i32) -> (i32, i32) {
    %c0_i32 = arith.constant 0 : i32
    %c0_i32_0 = arith.constant 0 : i32
    %c0_i32_1 = arith.constant 0 : i32
    return %c0_i32, %c0_i32_0 : i32, i32
  }
  func.func @transform_2(%arg0: i32) -> (i32, i32) {
    %c0_i32 = arith.constant 0 : i32
    %c0_i32_0 = arith.constant 0 : i32
    %c0_i32_1 = arith.constant 0 : i32
    return %c0_i32, %c0_i32_0 : i32, i32
  }
  func.func @transform_3(%arg0: i32) -> (i32, i32) {
    %c0_i32 = arith.constant 0 : i32
    %c0_i32_0 = arith.constant 0 : i32
    return %arg0, %c0_i32 : i32, i32
  }
}

</mosaic_0001>

<llo_original>
// kernel: tpu_custom_call.1
$region0: #{tpu_custom_call.1}
  #allocation0 [shape = 'u32[]', space=smem, size = 0x4, offset = 0x4, fixed_abs, tag = 'smem constant byte address 0x4 - core index']
  #allocation1 [shape = 'u32[144,128]{1,0:T(1,128)}', space=vmem, size = 0x12000, scoped, tag = 'internal scratch']
  %s0 = inlined_call_operand.hbm [shape: f32[8,80], index: 0, kind: input, shape index: {}]
  %s1 = inlined_call_operand.hbm [shape: bf16[80,512], index: 1, kind: input, shape index: {}]
  %s2 = inlined_call_operand.vmem [shape: bf16[1,512], index: 2, kind: input, shape index: {}]
  %s3 = inlined_call_operand.hbm [shape: f32[8,512], index: 3, kind: output, shape index: {}]
  %s4 = sld [smem:[#allocation0]]
  $region30: #{tpu_custom_call.1} parent=0
    _
  %s6 = ssub.s32 1, %s4
  %s7 = scalar_select 0, %s6, %s4
  $region1: #{tpu_custom_call.1} parent=0
    #allocation2 [shape = 'u8[4096]{0}', space=vmem, size = 0x1000, scoped, tag = 'input window, operand 0, single buffered']
    #allocation3 [shape = 's32[1]{0}', space=sflag, size = 0x4, scoped, tag = 'scoped memory for tpu_custom_call.1']
    #allocation4 [shape = 's32[1]{0}', space=sflag, size = 0x4, scoped, tag = 'scoped memory for tpu_custom_call.1']
    #allocation5 [shape = 'u8[81920]{0}', space=vmem, size = 0x14000, scoped, tag = 'input window, operand 1, single buffered']
    #allocation6 [shape = 's32[1]{0}', space=sflag, size = 0x4, scoped, tag = 'scoped memory for tpu_custom_call.1']
    #allocation7 [shape = 'u8[16384]{0}', space=vmem, size = 0x4000, scoped, tag = 'output window, operand 0, single buffered']
    %8 = vsyncpa [#allocation3], 0
    %9 = vsyncpa [#allocation6], 0
    %10 = vsyncpa [#allocation4], 0
    // Predicated region
    $region2: #{tpu_custom_call.1} parent=1 // pred_check
      _
    $region3: #{tpu_custom_call.1} parent=1 // pred_check_branch
      %12 = sbr.rel (0) target = $region5
    $region4: #{tpu_custom_call.1} parent=1 // pred_region
      %s14 = ssub.s32 128, 128
      %15 = vsyncadd [#allocation3], %s14
      %s17 = sshll.u32 [#allocation2], 4
      %s18 = int_to_ptr.vmem [resolvable:$true] %s17
      %20 = dma.hbm_to_vmem [thread:$0]  %s0, 128, %s18, [#allocation3]
    $region5: #{tpu_custom_call.1} parent=1 // pred_fallthru
      _
    // Predicated region
    $region6: #{tpu_custom_call.1} parent=1 // pred_check
      _
    $region7: #{tpu_custom_call.1} parent=1 // pred_check_branch
      %22 = sbr.rel (0) target = $region9
    $region8: #{tpu_custom_call.1} parent=1 // pred_region
      %s24 = ssub.s32 2560, 2560
      %25 = vsyncadd [#allocation6], %s24
      %s26 = sshll.u32 [#allocation5], 4
      %s27 = int_to_ptr.vmem [resolvable:$true] %s26
      %32 = dma.hbm_to_vmem [thread:$0]  %s1, 2560, %s27, [#allocation6], 256, 256, 16
    $region9: #{tpu_custom_call.1} parent=1 // pred_fallthru
      _
    // Predicated region
    $region10: #{tpu_custom_call.1} parent=1 // pred_check
      _
    $region11: #{tpu_custom_call.1} parent=1 // pred_check_branch
      %34 = sbr.rel (0) target = $region13
    $region12: #{tpu_custom_call.1} parent=1 // pred_region
      _
    $region13: #{tpu_custom_call.1} parent=1 // pred_fallthru
      _
    // Predicated region
    $region14: #{tpu_custom_call.1} parent=1 // pred_check
      _
    $region15: #{tpu_custom_call.1} parent=1 // pred_check_branch
      %36 = sbr.rel (0) target = $region17
    $region16: #{tpu_custom_call.1} parent=1 // pred_region
      %37 = dma.done [#allocation3], 128
    $region17: #{tpu_custom_call.1} parent=1 // pred_fallthru
      _
    // Predicated region
    $region18: #{tpu_custom_call.1} parent=1 // pred_check
      _
    $region19: #{tpu_custom_call.1} parent=1 // pred_check_branch
      %39 = sbr.rel (0) target = $region21
    $region20: #{tpu_custom_call.1} parent=1 // pred_region
      %40 = dma.done [#allocation6], 2560
    $region21: #{tpu_custom_call.1} parent=1 // pred_fallthru
      _
    %v42 = vld [vmem:[#allocation2] sm:$0xff]
    %v43 = vpack.c.bf16 %v42, %v42
    %v44 = vld [vmem:[#allocation5] sm:$0xff]
    %v45 = vld [vmem:[#allocation5 + $0x8] sm:$0xff]
    %v46 = vld [vmem:[#allocation5 + $0x10] sm:$0xff]
    %v47 = vld [vmem:[#allocation5 + $0x18] sm:$0xff]
    %v48 = vld [vmem:[#allocation5 + $0x20] sm:$0xff]
    %v49 = vld [vmem:[#allocation5 + $0x28] sm:$0xff]
    %v50 = vld [vmem:[#allocation5 + $0x30] sm:$0xff]
    %v51 = vld [vmem:[#allocation5 + $0x38] sm:$0xff]
    %v52 = vld [vmem:[#allocation5 + $0x40] sm:$0xff]
    %v53 = vld [vmem:[#allocation5 + $0x48] sm:$0xff]
    %v54 = vld [vmem:[#allocation5 + $0x50] sm:$0xff]
    %v55 = vld [vmem:[#allocation5 + $0x58] sm:$0xff]
    %v56 = vld [vmem:[#allocation5 + $0x60] sm:$0xff]
    %v57 = vld [vmem:[#allocation5 + $0x68] sm:$0xff]
    %v58 = vld [vmem:[#allocation5 + $0x70] sm:$0xff]
    %v59 = vld [vmem:[#allocation5 + $0x78] sm:$0xff]
    %v60 = vld [vmem:[#allocation5 + $0x80] sm:$0xff]
    %v61 = vld [vmem:[#allocation5 + $0x88] sm:$0xff]
    %v62 = vld [vmem:[#allocation5 + $0x90] sm:$0xff]
    %v63 = vld [vmem:[#allocation5 + $0x98] sm:$0xff]
    %v64 = vld [vmem:[%s2] sm:$0xf]
    %v65 = vunpack.c.l.bf16 %v64
    %v67 = vlaneseq
    %v68 = vshrl.u32 %v67, 7
    %v69 = vsub.s32 0, %v68
    %v70 = vrot.slane %v65, %v69
    %v71 = vlaneseq
    %v72 = vshrl.u32 %v71, 7
    %v73 = vsub.s32 2, %v72
    %v74 = vrot.slane %v65, %v73
    %v75 = vlaneseq
    %v76 = vshrl.u32 %v75, 7
    %v77 = vsub.s32 4, %v76
    %v78 = vrot.slane %v65, %v77
    %v79 = vlaneseq
    %v80 = vshrl.u32 %v79, 7
    %v81 = vsub.s32 6, %v80
    %v82 = vrot.slane %v65, %v81
    %v87 = vlaneseq
    %v88 = vshrl.u32 %v87, 7
    %v89 = vsub.s32 0, %v88
    %v90 = vrot.slane %v70, %v89
    %v91 = vlaneseq
    %v92 = vshrl.u32 %v91, 7
    %v93 = vsub.s32 0, %v92
    %v94 = vrot.slane %v74, %v93
    %v95 = vlaneseq
    %v96 = vshrl.u32 %v95, 7
    %v97 = vsub.s32 0, %v96
    %v98 = vrot.slane %v78, %v97
    %v99 = vlaneseq
    %v100 = vshrl.u32 %v99, 7
    %v101 = vsub.s32 0, %v100
    %v102 = vrot.slane %v82, %v101
    %v123 = vunpack.c.l.b16 %v44
    %v124 = vunpack.c.h.b16 %v44
    %v125 = vunpack.c.l.b16 %v45
    %v126 = vunpack.c.h.b16 %v45
    %v127 = vunpack.c.l.b16 %v46
    %v128 = vunpack.c.h.b16 %v46
    %v129 = vunpack.c.l.b16 %v47
    %v130 = vunpack.c.h.b16 %v47
    %v131 = vunpack.c.l.b16 %v48
    %v132 = vunpack.c.h.b16 %v48
    %v133 = vunpack.c.l.b16 %v49
    %v134 = vunpack.c.h.b16 %v49
    %v135 = vunpack.c.l.b16 %v50
    %v136 = vunpack.c.h.b16 %v50
    %v137 = vunpack.c.l.b16 %v51
    %v138 = vunpack.c.h.b16 %v51
    %v139 = vunpack.c.l.b16 %v52
    %v140 = vunpack.c.h.b16 %v52
    %v141 = vunpack.c.l.b16 %v53
    %v142 = vunpack.c.h.b16 %v53
    %v143 = vunpack.c.l.b16 %v54
    %v144 = vunpack.c.h.b16 %v54
    %v145 = vunpack.c.l.b16 %v55
    %v146 = vunpack.c.h.b16 %v55
    %v147 = vunpack.c.l.b16 %v56
    %v148 = vunpack.c.h.b16 %v56
    %v149 = vunpack.c.l.b16 %v57
    %v150 = vunpack.c.h.b16 %v57
    %v151 = vunpack.c.l.b16 %v58
    %v152 = vunpack.c.h.b16 %v58
    %v153 = vunpack.c.l.b16 %v59
    %v154 = vunpack.c.h.b16 %v59
    %v155 = vunpack.c.l.b16 %v60
    %v156 = vunpack.c.h.b16 %v60
    %v157 = vunpack.c.l.b16 %v61
    %v158 = vunpack.c.h.b16 %v61
    %v159 = vunpack.c.l.b16 %v62
    %v160 = vunpack.c.h.b16 %v62
    %v161 = vunpack.c.l.b16 %v63
    %v162 = vunpack.c.h.b16 %v63
    %v163 = vpack.c.b16 %v127, %v123
    %v164 = vpack.c.b16 %v128, %v124
    %v165 = vpack.c.b16 %v129, %v125
    %v166 = vpack.c.b16 %v130, %v126
    %v167 = vpack.c.b16 %v135, %v131
    %v168 = vpack.c.b16 %v136, %v132
    %v169 = vpack.c.b16 %v137, %v133
    %v170 = vpack.c.b16 %v138, %v134
    %v171 = vpack.c.b16 %v143, %v139
    %v172 = vpack.c.b16 %v144, %v140
    %v173 = vpack.c.b16 %v145, %v141
    %v174 = vpack.c.b16 %v146, %v142
    %v175 = vpack.c.b16 %v151, %v147
    %v176 = vpack.c.b16 %v152, %v148
    %v177 = vpack.c.b16 %v153, %v149
    %v178 = vpack.c.b16 %v154, %v150
    %v179 = vpack.c.b16 %v159, %v155
    %v180 = vpack.c.b16 %v160, %v156
    %v181 = vpack.c.b16 %v161, %v157
    %v182 = vpack.c.b16 %v162, %v158
    %vm203 = vcmask 654336
    %v205 = vsel %vm203, %v43, 0
    %207 = vmatprep.subr.bf16.mxu0 %v164
    %208 = vmatpush1.bf16.msra.mxu0 %v163
    %209 = vmatprep.subr.bf16.mxu0 %v168
    %210 = vmatpush1.bf16.msra.mxu0 %v167
    %211 = vmatprep.subr.bf16.mxu0 %v172
    %212 = vmatpush1.bf16.msra.mxu0 %v171
    %213 = vmatprep.subr.bf16.mxu0 %v176
    %214 = vmatpush1.bf16.msra.mxu0 %v175
    %215 = vmatprep.subr.bf16.mxu0 %v180
    %216 = vmatpush1.bf16.msra.mxu0 %v179
    %217 = vmatprep.subr.bf16.mxu0 0
    %218 = vmatpush1.bf16.msra.mxu0 0
    %219 = vmatprep.subr.bf16.mxu0 0
    %220 = vmatpush1.bf16.msra.mxu0 0
    %221 = vmatprep.subr.bf16.mxu0 0
    %222 = vmatpush1.bf16.msra.mxu0 0
    %223 = vmatprep.subr.bf16.mxu0 0
    %224 = vmatpush1.bf16.msra.mxu0 0
    %225 = vmatprep.subr.bf16.mxu0 0
    %226 = vmatpush1.bf16.msra.mxu0 0
    %227 = vmatprep.subr.bf16.mxu0 0
    %228 = vmatpush1.bf16.msra.mxu0 0
    %229 = vmatprep.subr.bf16.mxu0 0
    %230 = vmatpush1.bf16.msra.mxu0 0
    %231 = vmatprep.subr.bf16.mxu0 0
    %232 = vmatpush1.bf16.msra.mxu0 0
    %233 = vmatprep.subr.bf16.mxu0 0
    %234 = vmatpush1.bf16.msra.mxu0 0
    %235 = vmatprep.subr.bf16.mxu0 0
    %236 = vmatpush1.bf16.msra.mxu0 0
    %237 = vmatprep.subr.bf16.mxu0 0
    %238 = vmatpush1.bf16.msra.mxu0 0
    %239 = vmatprep.mubr.bf16.mxu0 0
    %240 = vmatmul.mubr.bf16.gmra.mrb[0].mxu0 %v205
    %v241 = vpop.f32.mrb[0].mxu0
    %v242 = vadd.f32 %v90, %v241
    %v243 = vpop.f32.mrb[0].mxu0
    %v244 = vadd.f32 %v94, %v243
    %v245 = vpop.f32.mrb[0].mxu0
    %v246 = vpop.f32.mrb[0].mxu0
    %247 = vdwg.mxu0
    %248 = vmatprep.subr.bf16.mxu0 %v166
    %249 = vmatpush1.bf16.msra.mxu0 %v165
    %250 = vmatprep.subr.bf16.mxu0 %v170
    %251 = vmatpush1.bf16.msra.mxu0 %v169
    %252 = vmatprep.subr.bf16.mxu0 %v174
    %253 = vmatpush1.bf16.msra.mxu0 %v173
    %254 = vmatprep.subr.bf16.mxu0 %v178
    %255 = vmatpush1.bf16.msra.mxu0 %v177
    %256 = vmatprep.subr.bf16.mxu0 %v182
    %257 = vmatpush1.bf16.msra.mxu0 %v181
    %258 = vmatprep.subr.bf16.mxu0 0
    %259 = vmatpush1.bf16.msra.mxu0 0
    %260 = vmatprep.subr.bf16.mxu0 0
    %261 = vmatpush1.bf16.msra.mxu0 0
    %262 = vmatprep.subr.bf16.mxu0 0
    %263 = vmatpush1.bf16.msra.mxu0 0
    %264 = vmatprep.subr.bf16.mxu0 0
    %265 = vmatpush1.bf16.msra.mxu0 0
    %266 = vmatprep.subr.bf16.mxu0 0
    %267 = vmatpush1.bf16.msra.mxu0 0
    %268 = vmatprep.subr.bf16.mxu0 0
    %269 = vmatpush1.bf16.msra.mxu0 0
    %270 = vmatprep.subr.bf16.mxu0 0
    %271 = vmatpush1.bf16.msra.mxu0 0
    %272 = vmatprep.subr.bf16.mxu0 0
    %273 = vmatpush1.bf16.msra.mxu0 0
    %274 = vmatprep.subr.bf16.mxu0 0
    %275 = vmatpush1.bf16.msra.mxu0 0
    %276 = vmatprep.subr.bf16.mxu0 0
    %277 = vmatpush1.bf16.msra.mxu0 0
    %278 = vmatprep.subr.bf16.mxu0 0
    %279 = vmatpush1.bf16.msra.mxu0 0
    %280 = vmatprep.mubr.bf16.mxu0 0
    %281 = vmatmul.mubr.bf16.gmra.mrb[0].mxu0 %v205
    %v282 = vpop.f32.mrb[0].mxu0
    %v283 = vadd.f32 %v98, %v282
    %v284 = vpop.f32.mrb[0].mxu0
    %v285 = vadd.f32 %v102, %v284
    %v286 = vpop.f32.mrb[0].mxu0
    %v287 = vpop.f32.mrb[0].mxu0
    %288 = vdwg.mxu0
    %289 = vst [vmem:[#allocation7] sm:$0xff] %v242
    %290 = vst [vmem:[#allocation7 + $0x8] sm:$0xff] %v244
    %291 = vst [vmem:[#allocation7 + $0x10] sm:$0xff] %v283
    %292 = vst [vmem:[#allocation7 + $0x18] sm:$0xff] %v285
    // Predicated region
    $region22: #{tpu_custom_call.1} parent=1 // pred_check
      _
    $region23: #{tpu_custom_call.1} parent=1 // pred_check_branch
      %294 = sbr.rel (0) target = $region25
    $region24: #{tpu_custom_call.1} parent=1 // pred_region
      %s296 = ssub.s32 512, 512
      %297 = vsyncadd [#allocation4], %s296
      %s299 = sshll.u32 [#allocation7], 4
      %s300 = int_to_ptr.vmem [resolvable:$true] %s299
      %302 = dma.vmem_to_hbm [thread:$0]  %s300, 512, %s3, [#allocation4]
    $region25: #{tpu_custom_call.1} parent=1 // pred_fallthru
      _
    // Predicated region
    $region26: #{tpu_custom_call.1} parent=1 // pred_check
      _
    $region27: #{tpu_custom_call.1} parent=1 // pred_check_branch
      %304 = sbr.rel (0) target = $region29
    $region28: #{tpu_custom_call.1} parent=1 // pred_region
      %305 = dma.done [#allocation4], 512
    $region29: #{tpu_custom_call.1} parent=1 // pred_fallthru
      _
    %306 = vsyncpa [#allocation3], 1
    %307 = vsyncpa [#allocation6], 1
    %308 = vsyncpa [#allocation4], 1

</llo_original>
